<compile_context>
chip_gen: v6e
topology: v6e:2x2x1
jax: 0.10.0
libtpu: 0.0.40
codegen_flags: <defaults>
</compile_context>

<pallas_src>
import functools

import jax
import jax.numpy as jnp
from jax.experimental import pallas as pl
from jax.experimental.pallas import tpu as pltpu


def _make_kernel(f_in, n_h1, n_h2, n_out, cpb, n_chunks_total):
    """Builds the fused-MLP kernel for one (features, cpb, chunk) block."""

    def kernel(x_ref, w1_ref, b1_ref, w2_ref, b2_ref, w3_ref, b3_ref, o_ref):
        # x_ref : (f_in, cpb, chunk)      activations, batch on the lane axis
        # w*_ref: (n_in, n_out, chunk)    weight columns pre-broadcast to lanes
        # b*_ref: (n_out, chunk)          biases pre-broadcast to lanes
        # o_ref : (n_out, cpb, chunk)
        i = pl.program_id(0)
        # Ragged last block: only process chunks that are inside the array.
        n_valid = jnp.minimum(cpb, n_chunks_total - i * cpb)

        def chunk_body(c, carry):
            xc = x_ref[:, c, :]                           # (f_in, chunk)

            # ---- input_layer (f_in -> n_h1) + ReLU: unrolled VPU MACs ----
            acc = b1_ref[...]                             # bias seeds the acc
            for k in range(f_in):
                acc = acc + w1_ref[k] * xc[k:k + 1, :]
            h1 = jnp.maximum(acc, 0.0)                    # (n_h1, chunk)

            # ---- hidden_layer_1 (n_h1 -> n_h2) + ReLU ----
            acc = b2_ref[...]
            for k in range(n_h1):
                acc = acc + w2_ref[k] * h1[k:k + 1, :]
            h2 = jnp.maximum(acc, 0.0)                    # (n_h2, chunk)

            # ---- output_layer (n_h2 -> n_out) + sigmoid ----
            acc = b3_ref[...]
            for k in range(n_h2):
                acc = acc + w3_ref[k] * h2[k:k + 1, :]
            # sigmoid via EUP exp + reciprocal (divide kept off the VALU).
            # approx=False so the f32 reference check holds; flip to approx=True
            # in production if ~1e-4 error is acceptable.
            y = pl.reciprocal(1.0 + jnp.exp(-acc), approx=False)

            o_ref[:, c, :] = y.astype(o_ref.dtype)        # lane-dense store
            return carry

        jax.lax.fori_loop(0, n_valid, chunk_body, 0)

    return kernel


@functools.partial(jax.jit, static_argnames=("block_b", "chunk"))
def simple_model_forward_fm(xt, params, *, block_b=32768, chunk=512):
    """Feature-major entry point: xt is (input_size, B) -> (n_classes, B).

    Recommended production path: no transposes, and no padding pass when B is
    already a multiple of `chunk`.
    """
    w1, b1, w2, b2, w3, b3 = params
    f_in, bsz = xt.shape
    n_h1, n_h2, n_out = w1.shape[0], w2.shape[0], w3.shape[0]
    assert chunk % 128 == 0, "chunk must be a multiple of the 128-lane width"

    # Pad the batch up to a chunk multiple (skipped when already aligned).
    n_chunks = pl.cdiv(bsz, chunk)
    bsz_p = n_chunks * chunk
    if bsz_p != bsz:
        xt = jnp.pad(xt, ((0, 0), (0, bsz_p - bsz)))
    x3 = xt.reshape(f_in, n_chunks, chunk)       # free: identical memory order

    # Chunks per grid block: as large as requested; must be divisible by 8
    # (sublane tiling of the block's second-minor dim) unless one block covers
    # the whole chunk axis.
    cpb_req = max(1, block_b // chunk)
    if cpb_req >= n_chunks:
        cpb = n_chunks
    else:
        cpb = (cpb_req // 8) * 8
        if cpb == 0:
            cpb = n_chunks if n_chunks < 8 else 8
    grid = (pl.cdiv(n_chunks, cpb),)

    # Pre-broadcast weight columns / biases to lane width once (<= a few
    # hundred KB) so the kernel's MAC chain has no in-loop weight broadcasts.
    w1b = jnp.broadcast_to(w1.T[:, :, None], (f_in, n_h1, chunk))
    w2b = jnp.broadcast_to(w2.T[:, :, None], (n_h1, n_h2, chunk))
    w3b = jnp.broadcast_to(w3.T[:, :, None], (n_h2, n_out, chunk))
    b1b = jnp.broadcast_to(b1[:, None], (n_h1, chunk))
    b2b = jnp.broadcast_to(b2[:, None], (n_h2, chunk))
    b3b = jnp.broadcast_to(b3[:, None], (n_out, chunk))

    kernel = _make_kernel(f_in, n_h1, n_h2, n_out, cpb, n_chunks)
    full3 = lambda a: pl.BlockSpec(a.shape, lambda i: (0, 0, 0))  # VMEM-resident
    full2 = lambda a: pl.BlockSpec(a.shape, lambda i: (0, 0))

    out3 = pl.pallas_call(
        kernel,
        out_shape=jax.ShapeDtypeStruct((n_out, n_chunks, chunk), jnp.float32),
        grid_spec=pltpu.PrefetchScalarGridSpec(
            num_scalar_prefetch=0,
            grid=grid,
            in_specs=[
                pl.BlockSpec((f_in, cpb, chunk), lambda i: (0, i, 0)),
                full3(w1b), full2(b1b),
                full3(w2b), full2(b2b),
                full3(w3b), full2(b3b),
            ],
            out_specs=pl.BlockSpec((n_out, cpb, chunk), lambda i: (0, i, 0)),
        ),
        compiler_params=pltpu.CompilerParams(
            # Blocks are independent -> shard grid steps across v7x's two TCs.
            dimension_semantics=("parallel",),
        ),
    )(x3, w1b, b1b, w2b, b2b, w3b, b3b)

    out = out3.reshape(n_out, bsz_p)             # free
    if bsz_p != bsz:
        out = out[:, :bsz]
    return out


@functools.partial(jax.jit, static_argnames=("block_b", "chunk"))
def simple_model_forward(x, params, *, block_b=32768, chunk=512):
    """PyTorch-layout wrapper: x (B, input_size) -> (B, n_classes).

    Adds the one-time transposes at the API boundary; prefer
    simple_model_forward_fm (feature-major) in a real pipeline to avoid them.
    """
    out_fm = simple_model_forward_fm(x.T, params, block_b=block_b, chunk=chunk)
    return out_fm.T


def init_params(key, input_size, n_classes):
    """PyTorch nn.Linear default init: U[-1/sqrt(fan_in), 1/sqrt(fan_in)].
    W stored (out_features, in_features) as in PyTorch; b as (out_features,)."""
    dims = [(input_size, 8), (8, 16), (16, n_classes)]
    params = []
    for fan_in, fan_out in dims:
        key, kw, kb = jax.random.split(key, 3)
        bound = 1.0 / jnp.sqrt(float(fan_in))
        w = jax.random.uniform(kw, (fan_out, fan_in), jnp.float32, -bound, bound)
        b = jax.random.uniform(kb, (fan_out,), jnp.float32, -bound, bound)
        params.extend([w, b])
    return tuple(params)


def reference_forward(x, params):
    w1, b1, w2, b2, w3, b3 = params
    hi = jax.lax.Precision.HIGHEST  # true-f32 reference matmuls
    h1 = jnp.maximum(jnp.dot(x, w1.T, precision=hi) + b1, 0.0)
    h2 = jnp.maximum(jnp.dot(h1, w2.T, precision=hi) + b2, 0.0)
    return jax.nn.sigmoid(jnp.dot(h2, w3.T, precision=hi) + b3)


if __name__ == "__main__":
    # Skin-segmentation dataset: 3 input features (B, G, R), 2 classes.
    input_size, n_classes = 3, 2
    batch = 5000  # deliberately not a multiple of chunk/block sizes

    key = jax.random.PRNGKey(0)
    kx, kp = jax.random.split(key)
    x = jax.random.normal(kx, (batch, input_size), jnp.float32)
    params = init_params(kp, input_size, n_classes)

    # Small block/chunk for the demo so this run exercises a multi-step
    # parallel grid (3 steps), a ragged last block (dynamic loop bound) and the
    # padding path.  For the real ~245k-row dataset keep the defaults
    # (chunk=512, block_b=32768 -> ~8 grid steps, 4 per v7x TensorCore).
    out = simple_model_forward(x, params, block_b=2048, chunk=256)
    out = jax.block_until_ready(out)

    ref = reference_forward(x, params)
    assert out.shape == (batch, n_classes)
    assert jnp.allclose(out, ref, atol=1e-5, rtol=1e-5), "mismatch vs reference"

    print("KERNEL_OK")
</pallas_src>

<mosaic_0001>
module attributes {stable_mosaic.version = 11 : i64} {
  func.func @kernel(%arg0: i32, %arg1: memref<3x8x256xf32, #tpu.memory_space<vmem>>, %arg2: memref<3x8x256xf32, #tpu.memory_space<vmem>>, %arg3: memref<8x256xf32, #tpu.memory_space<vmem>>, %arg4: memref<8x16x256xf32, #tpu.memory_space<vmem>>, %arg5: memref<16x256xf32, #tpu.memory_space<vmem>>, %arg6: memref<16x2x256xf32, #tpu.memory_space<vmem>>, %arg7: memref<2x256xf32, #tpu.memory_space<vmem>>, %arg8: memref<2x8x256xf32, #tpu.memory_space<vmem>>) attributes {dimension_semantics = [#tpu.dimension_semantics<parallel>], iteration_bounds = array<i64: 3>, scalar_prefetch = 0 : i64, scratch_operands = 0 : i64, tpu.core_type = #tpu.core_type<tc>, window_params = [{transform_indices = @transform_0, window_bounds = array<i64: 3, 8, 256>}, {pipeline_mode = #tpu.pipeline_mode<synchronous>, transform_indices = @transform_1, window_bounds = array<i64: 3, 8, 256>}, {pipeline_mode = #tpu.pipeline_mode<synchronous>, transform_indices = @transform_2, window_bounds = array<i64: 8, 256>}, {pipeline_mode = #tpu.pipeline_mode<synchronous>, transform_indices = @transform_3, window_bounds = array<i64: 8, 16, 256>}, {pipeline_mode = #tpu.pipeline_mode<synchronous>, transform_indices = @transform_4, window_bounds = array<i64: 16, 256>}, {pipeline_mode = #tpu.pipeline_mode<synchronous>, transform_indices = @transform_5, window_bounds = array<i64: 16, 2, 256>}, {pipeline_mode = #tpu.pipeline_mode<synchronous>, transform_indices = @transform_6, window_bounds = array<i64: 2, 256>}, {transform_indices = @transform_7, window_bounds = array<i64: 2, 8, 256>}]} {
    %c8_i32 = arith.constant 8 : i32
    %0 = arith.muli %arg0, %c8_i32 : i32
    %c20_i32 = arith.constant 20 : i32
    %1 = arith.subi %c20_i32, %0 : i32
    %c8_i32_0 = arith.constant 8 : i32
    %2 = arith.minsi %c8_i32_0, %1 : i32
    %c0_i32 = arith.constant 0 : i32
    %c0_i32_1 = arith.constant 0 : i32
    %3 = arith.subi %2, %c0_i32_1 : i32
    %4 = arith.addi %c0_i32_1, %3 : i32
    %c1_i32 = arith.constant 1 : i32
    scf.for %arg9 = %c0_i32_1 to %4 step %c1_i32  : i32 {
      %c0 = arith.constant 0 : index
      %5 = arith.index_cast %arg9 : i32 to index
      %c0_2 = arith.constant 0 : index
      %6 = vector.load %arg1[%c0, %5, %c0_2] : memref<3x8x256xf32, #tpu.memory_space<vmem>>, vector<3x1x256xf32>
      %7 = vector.shape_cast %6 : vector<3x1x256xf32> to vector<3x256xf32>
      %c0_3 = arith.constant 0 : index
      %c0_4 = arith.constant 0 : index
      %8 = vector.load %arg3[%c0_3, %c0_4] : memref<8x256xf32, #tpu.memory_space<vmem>>, vector<8x256xf32>
      %c0_5 = arith.constant 0 : index
      %c0_6 = arith.constant 0 : index
      %c0_7 = arith.constant 0 : index
      %9 = vector.load %arg2[%c0_5, %c0_6, %c0_7] : memref<3x8x256xf32, #tpu.memory_space<vmem>>, vector<1x8x256xf32>
      %10 = vector.shape_cast %9 : vector<1x8x256xf32> to vector<8x256xf32>
      %11 = vector.extract_strided_slice %7 {offsets = [0, 0], sizes = [1, 256], strides = [1, 1]} : vector<3x256xf32> to vector<1x256xf32>
      %12 = vector.broadcast %11 : vector<1x256xf32> to vector<8x256xf32>
      %13 = arith.mulf %10, %12 : vector<8x256xf32>
      %14 = arith.addf %8, %13 : vector<8x256xf32>
      %c1 = arith.constant 1 : index
      %c0_8 = arith.constant 0 : index
      %c0_9 = arith.constant 0 : index
      %15 = vector.load %arg2[%c1, %c0_8, %c0_9] : memref<3x8x256xf32, #tpu.memory_space<vmem>>, vector<1x8x256xf32>
      %16 = vector.shape_cast %15 : vector<1x8x256xf32> to vector<8x256xf32>
      %17 = vector.extract_strided_slice %7 {offsets = [1, 0], sizes = [1, 256], strides = [1, 1]} : vector<3x256xf32> to vector<1x256xf32>
      %18 = vector.broadcast %17 : vector<1x256xf32> to vector<8x256xf32>
      %19 = arith.mulf %16, %18 : vector<8x256xf32>
      %20 = arith.addf %14, %19 : vector<8x256xf32>
      %c2 = arith.constant 2 : index
      %c0_10 = arith.constant 0 : index
      %c0_11 = arith.constant 0 : index
      %21 = vector.load %arg2[%c2, %c0_10, %c0_11] : memref<3x8x256xf32, #tpu.memory_space<vmem>>, vector<1x8x256xf32>
      %22 = vector.shape_cast %21 : vector<1x8x256xf32> to vector<8x256xf32>
      %23 = vector.extract_strided_slice %7 {offsets = [2, 0], sizes = [1, 256], strides = [1, 1]} : vector<3x256xf32> to vector<1x256xf32>
      %24 = vector.broadcast %23 : vector<1x256xf32> to vector<8x256xf32>
      %25 = arith.mulf %22, %24 : vector<8x256xf32>
      %26 = arith.addf %20, %25 : vector<8x256xf32>
      %cst = arith.constant 0.000000e+00 : f32
      %27 = vector.broadcast %cst : f32 to vector<8x256xf32>
      %28 = arith.maximumf %26, %27 : vector<8x256xf32>
      %c0_12 = arith.constant 0 : index
      %c0_13 = arith.constant 0 : index
      %29 = vector.load %arg5[%c0_12, %c0_13] : memref<16x256xf32, #tpu.memory_space<vmem>>, vector<16x256xf32>
      %c0_14 = arith.constant 0 : index
      %c0_15 = arith.constant 0 : index
      %c0_16 = arith.constant 0 : index
      %30 = vector.load %arg4[%c0_14, %c0_15, %c0_16] : memref<8x16x256xf32, #tpu.memory_space<vmem>>, vector<1x16x256xf32>
      %31 = vector.shape_cast %30 : vector<1x16x256xf32> to vector<16x256xf32>
      %32 = vector.extract_strided_slice %28 {offsets = [0, 0], sizes = [1, 256], strides = [1, 1]} : vector<8x256xf32> to vector<1x256xf32>
      %33 = vector.broadcast %32 : vector<1x256xf32> to vector<16x256xf32>
      %34 = arith.mulf %31, %33 : vector<16x256xf32>
      %35 = arith.addf %29, %34 : vector<16x256xf32>
      %c1_17 = arith.constant 1 : index
      %c0_18 = arith.constant 0 : index
      %c0_19 = arith.constant 0 : index
      %36 = vector.load %arg4[%c1_17, %c0_18, %c0_19] : memref<8x16x256xf32, #tpu.memory_space<vmem>>, vector<1x16x256xf32>
      %37 = vector.shape_cast %36 : vector<1x16x256xf32> to vector<16x256xf32>
      %38 = vector.extract_strided_slice %28 {offsets = [1, 0], sizes = [1, 256], strides = [1, 1]} : vector<8x256xf32> to vector<1x256xf32>
      %39 = vector.broadcast %38 : vector<1x256xf32> to vector<16x256xf32>
      %40 = arith.mulf %37, %39 : vector<16x256xf32>
      %41 = arith.addf %35, %40 : vector<16x256xf32>
      %c2_20 = arith.constant 2 : index
      %c0_21 = arith.constant 0 : index
      %c0_22 = arith.constant 0 : index
      %42 = vector.load %arg4[%c2_20, %c0_21, %c0_22] : memref<8x16x256xf32, #tpu.memory_space<vmem>>, vector<1x16x256xf32>
      %43 = vector.shape_cast %42 : vector<1x16x256xf32> to vector<16x256xf32>
      %44 = vector.extract_strided_slice %28 {offsets = [2, 0], sizes = [1, 256], strides = [1, 1]} : vector<8x256xf32> to vector<1x256xf32>
      %45 = vector.broadcast %44 : vector<1x256xf32> to vector<16x256xf32>
      %46 = arith.mulf %43, %45 : vector<16x256xf32>
      %47 = arith.addf %41, %46 : vector<16x256xf32>
      %c3 = arith.constant 3 : index
      %c0_23 = arith.constant 0 : index
      %c0_24 = arith.constant 0 : index
      %48 = vector.load %arg4[%c3, %c0_23, %c0_24] : memref<8x16x256xf32, #tpu.memory_space<vmem>>, vector<1x16x256xf32>
      %49 = vector.shape_cast %48 : vector<1x16x256xf32> to vector<16x256xf32>
      %50 = vector.extract_strided_slice %28 {offsets = [3, 0], sizes = [1, 256], strides = [1, 1]} : vector<8x256xf32> to vector<1x256xf32>
      %51 = vector.broadcast %50 : vector<1x256xf32> to vector<16x256xf32>
      %52 = arith.mulf %49, %51 : vector<16x256xf32>
      %53 = arith.addf %47, %52 : vector<16x256xf32>
      %c4 = arith.constant 4 : index
      %c0_25 = arith.constant 0 : index
      %c0_26 = arith.constant 0 : index
      %54 = vector.load %arg4[%c4, %c0_25, %c0_26] : memref<8x16x256xf32, #tpu.memory_space<vmem>>, vector<1x16x256xf32>
      %55 = vector.shape_cast %54 : vector<1x16x256xf32> to vector<16x256xf32>
      %56 = vector.extract_strided_slice %28 {offsets = [4, 0], sizes = [1, 256], strides = [1, 1]} : vector<8x256xf32> to vector<1x256xf32>
      %57 = vector.broadcast %56 : vector<1x256xf32> to vector<16x256xf32>
      %58 = arith.mulf %55, %57 : vector<16x256xf32>
      %59 = arith.addf %53, %58 : vector<16x256xf32>
      %c5 = arith.constant 5 : index
      %c0_27 = arith.constant 0 : index
      %c0_28 = arith.constant 0 : index
      %60 = vector.load %arg4[%c5, %c0_27, %c0_28] : memref<8x16x256xf32, #tpu.memory_space<vmem>>, vector<1x16x256xf32>
      %61 = vector.shape_cast %60 : vector<1x16x256xf32> to vector<16x256xf32>
      %62 = vector.extract_strided_slice %28 {offsets = [5, 0], sizes = [1, 256], strides = [1, 1]} : vector<8x256xf32> to vector<1x256xf32>
      %63 = vector.broadcast %62 : vector<1x256xf32> to vector<16x256xf32>
      %64 = arith.mulf %61, %63 : vector<16x256xf32>
      %65 = arith.addf %59, %64 : vector<16x256xf32>
      %c6 = arith.constant 6 : index
      %c0_29 = arith.constant 0 : index
      %c0_30 = arith.constant 0 : index
      %66 = vector.load %arg4[%c6, %c0_29, %c0_30] : memref<8x16x256xf32, #tpu.memory_space<vmem>>, vector<1x16x256xf32>
      %67 = vector.shape_cast %66 : vector<1x16x256xf32> to vector<16x256xf32>
      %68 = vector.extract_strided_slice %28 {offsets = [6, 0], sizes = [1, 256], strides = [1, 1]} : vector<8x256xf32> to vector<1x256xf32>
      %69 = vector.broadcast %68 : vector<1x256xf32> to vector<16x256xf32>
      %70 = arith.mulf %67, %69 : vector<16x256xf32>
      %71 = arith.addf %65, %70 : vector<16x256xf32>
      %c7 = arith.constant 7 : index
      %c0_31 = arith.constant 0 : index
      %c0_32 = arith.constant 0 : index
      %72 = vector.load %arg4[%c7, %c0_31, %c0_32] : memref<8x16x256xf32, #tpu.memory_space<vmem>>, vector<1x16x256xf32>
      %73 = vector.shape_cast %72 : vector<1x16x256xf32> to vector<16x256xf32>
      %74 = vector.extract_strided_slice %28 {offsets = [7, 0], sizes = [1, 256], strides = [1, 1]} : vector<8x256xf32> to vector<1x256xf32>
      %75 = vector.broadcast %74 : vector<1x256xf32> to vector<16x256xf32>
      %76 = arith.mulf %73, %75 : vector<16x256xf32>
      %77 = arith.addf %71, %76 : vector<16x256xf32>
      %cst_33 = arith.constant 0.000000e+00 : f32
      %78 = vector.broadcast %cst_33 : f32 to vector<16x256xf32>
      %79 = arith.maximumf %77, %78 : vector<16x256xf32>
      %c0_34 = arith.constant 0 : index
      %c0_35 = arith.constant 0 : index
      %80 = vector.load %arg7[%c0_34, %c0_35] : memref<2x256xf32, #tpu.memory_space<vmem>>, vector<2x256xf32>
      %c0_36 = arith.constant 0 : index
      %c0_37 = arith.constant 0 : index
      %c0_38 = arith.constant 0 : index
      %81 = vector.load %arg6[%c0_36, %c0_37, %c0_38] : memref<16x2x256xf32, #tpu.memory_space<vmem>>, vector<1x2x256xf32>
      %82 = vector.shape_cast %81 : vector<1x2x256xf32> to vector<2x256xf32>
      %83 = vector.extract_strided_slice %79 {offsets = [0, 0], sizes = [1, 256], strides = [1, 1]} : vector<16x256xf32> to vector<1x256xf32>
      %84 = vector.broadcast %83 : vector<1x256xf32> to vector<2x256xf32>
      %85 = arith.mulf %82, %84 : vector<2x256xf32>
      %86 = arith.addf %80, %85 : vector<2x256xf32>
      %c1_39 = arith.constant 1 : index
      %c0_40 = arith.constant 0 : index
      %c0_41 = arith.constant 0 : index
      %87 = vector.load %arg6[%c1_39, %c0_40, %c0_41] : memref<16x2x256xf32, #tpu.memory_space<vmem>>, vector<1x2x256xf32>
      %88 = vector.shape_cast %87 : vector<1x2x256xf32> to vector<2x256xf32>
      %89 = vector.extract_strided_slice %79 {offsets = [1, 0], sizes = [1, 256], strides = [1, 1]} : vector<16x256xf32> to vector<1x256xf32>
      %90 = vector.broadcast %89 : vector<1x256xf32> to vector<2x256xf32>
      %91 = arith.mulf %88, %90 : vector<2x256xf32>
      %92 = arith.addf %86, %91 : vector<2x256xf32>
      %c2_42 = arith.constant 2 : index
      %c0_43 = arith.constant 0 : index
      %c0_44 = arith.constant 0 : index
      %93 = vector.load %arg6[%c2_42, %c0_43, %c0_44] : memref<16x2x256xf32, #tpu.memory_space<vmem>>, vector<1x2x256xf32>
      %94 = vector.shape_cast %93 : vector<1x2x256xf32> to vector<2x256xf32>
      %95 = vector.extract_strided_slice %79 {offsets = [2, 0], sizes = [1, 256], strides = [1, 1]} : vector<16x256xf32> to vector<1x256xf32>
      %96 = vector.broadcast %95 : vector<1x256xf32> to vector<2x256xf32>
      %97 = arith.mulf %94, %96 : vector<2x256xf32>
      %98 = arith.addf %92, %97 : vector<2x256xf32>
      %c3_45 = arith.constant 3 : index
      %c0_46 = arith.constant 0 : index
      %c0_47 = arith.constant 0 : index
      %99 = vector.load %arg6[%c3_45, %c0_46, %c0_47] : memref<16x2x256xf32, #tpu.memory_space<vmem>>, vector<1x2x256xf32>
      %100 = vector.shape_cast %99 : vector<1x2x256xf32> to vector<2x256xf32>
      %101 = vector.extract_strided_slice %79 {offsets = [3, 0], sizes = [1, 256], strides = [1, 1]} : vector<16x256xf32> to vector<1x256xf32>
      %102 = vector.broadcast %101 : vector<1x256xf32> to vector<2x256xf32>
      %103 = arith.mulf %100, %102 : vector<2x256xf32>
      %104 = arith.addf %98, %103 : vector<2x256xf32>
      %c4_48 = arith.constant 4 : index
      %c0_49 = arith.constant 0 : index
      %c0_50 = arith.constant 0 : index
      %105 = vector.load %arg6[%c4_48, %c0_49, %c0_50] : memref<16x2x256xf32, #tpu.memory_space<vmem>>, vector<1x2x256xf32>
      %106 = vector.shape_cast %105 : vector<1x2x256xf32> to vector<2x256xf32>
      %107 = vector.extract_strided_slice %79 {offsets = [4, 0], sizes = [1, 256], strides = [1, 1]} : vector<16x256xf32> to vector<1x256xf32>
      %108 = vector.broadcast %107 : vector<1x256xf32> to vector<2x256xf32>
      %109 = arith.mulf %106, %108 : vector<2x256xf32>
      %110 = arith.addf %104, %109 : vector<2x256xf32>
      %c5_51 = arith.constant 5 : index
      %c0_52 = arith.constant 0 : index
      %c0_53 = arith.constant 0 : index
      %111 = vector.load %arg6[%c5_51, %c0_52, %c0_53] : memref<16x2x256xf32, #tpu.memory_space<vmem>>, vector<1x2x256xf32>
      %112 = vector.shape_cast %111 : vector<1x2x256xf32> to vector<2x256xf32>
      %113 = vector.extract_strided_slice %79 {offsets = [5, 0], sizes = [1, 256], strides = [1, 1]} : vector<16x256xf32> to vector<1x256xf32>
      %114 = vector.broadcast %113 : vector<1x256xf32> to vector<2x256xf32>
      %115 = arith.mulf %112, %114 : vector<2x256xf32>
      %116 = arith.addf %110, %115 : vector<2x256xf32>
      %c6_54 = arith.constant 6 : index
      %c0_55 = arith.constant 0 : index
      %c0_56 = arith.constant 0 : index
      %117 = vector.load %arg6[%c6_54, %c0_55, %c0_56] : memref<16x2x256xf32, #tpu.memory_space<vmem>>, vector<1x2x256xf32>
      %118 = vector.shape_cast %117 : vector<1x2x256xf32> to vector<2x256xf32>
      %119 = vector.extract_strided_slice %79 {offsets = [6, 0], sizes = [1, 256], strides = [1, 1]} : vector<16x256xf32> to vector<1x256xf32>
      %120 = vector.broadcast %119 : vector<1x256xf32> to vector<2x256xf32>
      %121 = arith.mulf %118, %120 : vector<2x256xf32>
      %122 = arith.addf %116, %121 : vector<2x256xf32>
      %c7_57 = arith.constant 7 : index
      %c0_58 = arith.constant 0 : index
      %c0_59 = arith.constant 0 : index
      %123 = vector.load %arg6[%c7_57, %c0_58, %c0_59] : memref<16x2x256xf32, #tpu.memory_space<vmem>>, vector<1x2x256xf32>
      %124 = vector.shape_cast %123 : vector<1x2x256xf32> to vector<2x256xf32>
      %125 = vector.extract_strided_slice %79 {offsets = [7, 0], sizes = [1, 256], strides = [1, 1]} : vector<16x256xf32> to vector<1x256xf32>
      %126 = vector.broadcast %125 : vector<1x256xf32> to vector<2x256xf32>
      %127 = arith.mulf %124, %126 : vector<2x256xf32>
      %128 = arith.addf %122, %127 : vector<2x256xf32>
      %c8 = arith.constant 8 : index
      %c0_60 = arith.constant 0 : index
      %c0_61 = arith.constant 0 : index
      %129 = vector.load %arg6[%c8, %c0_60, %c0_61] : memref<16x2x256xf32, #tpu.memory_space<vmem>>, vector<1x2x256xf32>
      %130 = vector.shape_cast %129 : vector<1x2x256xf32> to vector<2x256xf32>
      %131 = vector.extract_strided_slice %79 {offsets = [8, 0], sizes = [1, 256], strides = [1, 1]} : vector<16x256xf32> to vector<1x256xf32>
      %132 = vector.broadcast %131 : vector<1x256xf32> to vector<2x256xf32>
      %133 = arith.mulf %130, %132 : vector<2x256xf32>
      %134 = arith.addf %128, %133 : vector<2x256xf32>
      %c9 = arith.constant 9 : index
      %c0_62 = arith.constant 0 : index
      %c0_63 = arith.constant 0 : index
      %135 = vector.load %arg6[%c9, %c0_62, %c0_63] : memref<16x2x256xf32, #tpu.memory_space<vmem>>, vector<1x2x256xf32>
      %136 = vector.shape_cast %135 : vector<1x2x256xf32> to vector<2x256xf32>
      %137 = vector.extract_strided_slice %79 {offsets = [9, 0], sizes = [1, 256], strides = [1, 1]} : vector<16x256xf32> to vector<1x256xf32>
      %138 = vector.broadcast %137 : vector<1x256xf32> to vector<2x256xf32>
      %139 = arith.mulf %136, %138 : vector<2x256xf32>
      %140 = arith.addf %134, %139 : vector<2x256xf32>
      %c10 = arith.constant 10 : index
      %c0_64 = arith.constant 0 : index
      %c0_65 = arith.constant 0 : index
      %141 = vector.load %arg6[%c10, %c0_64, %c0_65] : memref<16x2x256xf32, #tpu.memory_space<vmem>>, vector<1x2x256xf32>
      %142 = vector.shape_cast %141 : vector<1x2x256xf32> to vector<2x256xf32>
      %143 = vector.extract_strided_slice %79 {offsets = [10, 0], sizes = [1, 256], strides = [1, 1]} : vector<16x256xf32> to vector<1x256xf32>
      %144 = vector.broadcast %143 : vector<1x256xf32> to vector<2x256xf32>
      %145 = arith.mulf %142, %144 : vector<2x256xf32>
      %146 = arith.addf %140, %145 : vector<2x256xf32>
      %c11 = arith.constant 11 : index
      %c0_66 = arith.constant 0 : index
      %c0_67 = arith.constant 0 : index
      %147 = vector.load %arg6[%c11, %c0_66, %c0_67] : memref<16x2x256xf32, #tpu.memory_space<vmem>>, vector<1x2x256xf32>
      %148 = vector.shape_cast %147 : vector<1x2x256xf32> to vector<2x256xf32>
      %149 = vector.extract_strided_slice %79 {offsets = [11, 0], sizes = [1, 256], strides = [1, 1]} : vector<16x256xf32> to vector<1x256xf32>
      %150 = vector.broadcast %149 : vector<1x256xf32> to vector<2x256xf32>
      %151 = arith.mulf %148, %150 : vector<2x256xf32>
      %152 = arith.addf %146, %151 : vector<2x256xf32>
      %c12 = arith.constant 12 : index
      %c0_68 = arith.constant 0 : index
      %c0_69 = arith.constant 0 : index
      %153 = vector.load %arg6[%c12, %c0_68, %c0_69] : memref<16x2x256xf32, #tpu.memory_space<vmem>>, vector<1x2x256xf32>
      %154 = vector.shape_cast %153 : vector<1x2x256xf32> to vector<2x256xf32>
      %155 = vector.extract_strided_slice %79 {offsets = [12, 0], sizes = [1, 256], strides = [1, 1]} : vector<16x256xf32> to vector<1x256xf32>
      %156 = vector.broadcast %155 : vector<1x256xf32> to vector<2x256xf32>
      %157 = arith.mulf %154, %156 : vector<2x256xf32>
      %158 = arith.addf %152, %157 : vector<2x256xf32>
      %c13 = arith.constant 13 : index
      %c0_70 = arith.constant 0 : index
      %c0_71 = arith.constant 0 : index
      %159 = vector.load %arg6[%c13, %c0_70, %c0_71] : memref<16x2x256xf32, #tpu.memory_space<vmem>>, vector<1x2x256xf32>
      %160 = vector.shape_cast %159 : vector<1x2x256xf32> to vector<2x256xf32>
      %161 = vector.extract_strided_slice %79 {offsets = [13, 0], sizes = [1, 256], strides = [1, 1]} : vector<16x256xf32> to vector<1x256xf32>
      %162 = vector.broadcast %161 : vector<1x256xf32> to vector<2x256xf32>
      %163 = arith.mulf %160, %162 : vector<2x256xf32>
      %164 = arith.addf %158, %163 : vector<2x256xf32>
      %c14 = arith.constant 14 : index
      %c0_72 = arith.constant 0 : index
      %c0_73 = arith.constant 0 : index
      %165 = vector.load %arg6[%c14, %c0_72, %c0_73] : memref<16x2x256xf32, #tpu.memory_space<vmem>>, vector<1x2x256xf32>
      %166 = vector.shape_cast %165 : vector<1x2x256xf32> to vector<2x256xf32>
      %167 = vector.extract_strided_slice %79 {offsets = [14, 0], sizes = [1, 256], strides = [1, 1]} : vector<16x256xf32> to vector<1x256xf32>
      %168 = vector.broadcast %167 : vector<1x256xf32> to vector<2x256xf32>
      %169 = arith.mulf %166, %168 : vector<2x256xf32>
      %170 = arith.addf %164, %169 : vector<2x256xf32>
      %c15 = arith.constant 15 : index
      %c0_74 = arith.constant 0 : index
      %c0_75 = arith.constant 0 : index
      %171 = vector.load %arg6[%c15, %c0_74, %c0_75] : memref<16x2x256xf32, #tpu.memory_space<vmem>>, vector<1x2x256xf32>
      %172 = vector.shape_cast %171 : vector<1x2x256xf32> to vector<2x256xf32>
      %173 = vector.extract_strided_slice %79 {offsets = [15, 0], sizes = [1, 256], strides = [1, 1]} : vector<16x256xf32> to vector<1x256xf32>
      %174 = vector.broadcast %173 : vector<1x256xf32> to vector<2x256xf32>
      %175 = arith.mulf %172, %174 : vector<2x256xf32>
      %176 = arith.addf %170, %175 : vector<2x256xf32>
      %cst_76 = arith.constant 0.000000e+00 : f32
      %177 = vector.broadcast %cst_76 : f32 to vector<2x256xf32>
      %178 = arith.subf %177, %176 : vector<2x256xf32>
      %179 = math.exp %178 : vector<2x256xf32>
      %cst_77 = arith.constant 1.000000e+00 : f32
      %180 = vector.broadcast %cst_77 : f32 to vector<2x256xf32>
      %181 = arith.addf %180, %179 : vector<2x256xf32>
      %182 = tpu.reciprocal %181 : vector<2x256xf32> -> vector<2x256xf32>
      %c0_78 = arith.constant 0 : index
      %183 = arith.index_cast %arg9 : i32 to index
      %c0_79 = arith.constant 0 : index
      %184 = vector.load %arg8[%c0_78, %183, %c0_79] : memref<2x8x256xf32, #tpu.memory_space<vmem>>, vector<2x1x256xf32>
      %185 = vector.shape_cast %184 : vector<2x1x256xf32> to vector<2x256xf32>
      %186 = vector.shape_cast %182 : vector<2x256xf32> to vector<2x1x256xf32>
      tpu.vector_store %arg8[%c0_78, %183, %c0_79], %186 {strides = array<i32>} : memref<2x8x256xf32, #tpu.memory_space<vmem>>, vector<2x1x256xf32>,
    }
    return
  }
  func.func @transform_0(%arg0: i32) -> (i32, i32, i32) {
    %c0_i32 = arith.constant 0 : i32
    %c0_i32_0 = arith.constant 0 : i32
    %c0_i32_1 = arith.constant 0 : i32
    return %c0_i32, %arg0, %c0_i32_0 : i32, i32, i32
  }
  func.func @transform_1(%arg0: i32) -> (i32, i32, i32) {
    %c0_i32 = arith.constant 0 : i32
    %c0_i32_0 = arith.constant 0 : i32
    %c0_i32_1 = arith.constant 0 : i32
    %c0_i32_2 = arith.constant 0 : i32
    return %c0_i32, %c0_i32_0, %c0_i32_1 : i32, i32, i32
  }
  func.func @transform_2(%arg0: i32) -> (i32, i32) {
    %c0_i32 = arith.constant 0 : i32
    %c0_i32_0 = arith.constant 0 : i32
    %c0_i32_1 = arith.constant 0 : i32
    return %c0_i32, %c0_i32_0 : i32, i32
  }
  func.func @transform_3(%arg0: i32) -> (i32, i32, i32) {
    %c0_i32 = arith.constant 0 : i32
    %c0_i32_0 = arith.constant 0 : i32
    %c0_i32_1 = arith.constant 0 : i32
    %c0_i32_2 = arith.constant 0 : i32
    return %c0_i32, %c0_i32_0, %c0_i32_1 : i32, i32, i32
  }
  func.func @transform_4(%arg0: i32) -> (i32, i32) {
    %c0_i32 = arith.constant 0 : i32
    %c0_i32_0 = arith.constant 0 : i32
    %c0_i32_1 = arith.constant 0 : i32
    return %c0_i32, %c0_i32_0 : i32, i32
  }
  func.func @transform_5(%arg0: i32) -> (i32, i32, i32) {
    %c0_i32 = arith.constant 0 : i32
    %c0_i32_0 = arith.constant 0 : i32
    %c0_i32_1 = arith.constant 0 : i32
    %c0_i32_2 = arith.constant 0 : i32
    return %c0_i32, %c0_i32_0, %c0_i32_1 : i32, i32, i32
  }
  func.func @transform_6(%arg0: i32) -> (i32, i32) {
    %c0_i32 = arith.constant 0 : i32
    %c0_i32_0 = arith.constant 0 : i32
    %c0_i32_1 = arith.constant 0 : i32
    return %c0_i32, %c0_i32_0 : i32, i32
  }
  func.func @transform_7(%arg0: i32) -> (i32, i32, i32) {
    %c0_i32 = arith.constant 0 : i32
    %c0_i32_0 = arith.constant 0 : i32
    %c0_i32_1 = arith.constant 0 : i32
    return %c0_i32, %arg0, %c0_i32_0 : i32, i32, i32
  }
}

</mosaic_0001>

<llo_original>
// kernel: simple_model_forward_fm.1
$region0: #{simple_model_forward_fm.1}
  #allocation0 [shape = 'u32[]', space=smem, size = 0x4, offset = 0x4, fixed_abs, tag = 'smem constant byte address 0x4 - core index']
  #allocation1 [shape = 'u32[144,128]{1,0:T(1,128)}', space=vmem, size = 0x12000, scoped, tag = 'internal scratch']
  %s0 = inlined_call_operand.vmem [shape: f32[3,20,256], index: 0, kind: input, shape index: {}]
  %s1 = inlined_call_operand.vmem [shape: f32[3,8,256], index: 1, kind: input, shape index: {}]
  %s2 = inlined_call_operand.vmem [shape: f32[8,256], index: 2, kind: input, shape index: {}]
  %s3 = inlined_call_operand.vmem [shape: f32[8,16,256], index: 3, kind: input, shape index: {}]
  %s4 = inlined_call_operand.vmem [shape: f32[16,256], index: 4, kind: input, shape index: {}]
  %s5 = inlined_call_operand.vmem [shape: f32[16,2,256], index: 5, kind: input, shape index: {}]
  %s6 = inlined_call_operand.vmem [shape: f32[2,256], index: 6, kind: input, shape index: {}]
  %s7 = inlined_call_operand.vmem [shape: f32[2,20,256], index: 7, kind: output, shape index: {}]
  %s8 = sld [smem:[#allocation0]]
  $region110: #{simple_model_forward_fm.1} parent=0
    _
  %s10 = ssub.s32 1, %s8
  %s11 = scalar_select 0, %s10, %s8
  $region1: #{simple_model_forward_fm.1} parent=0
    #allocation2 [shape = 'u8[49152]{0}', space=vmem, size = 0xc000, scoped, tag = 'input window, operand 0']
    #allocation3 [shape = 'u8[32768]{0}', space=vmem, size = 0x8000, scoped, tag = 'output window, operand 0']
    loop: start=0, step=1, limit=5
    $region2: #{simple_model_forward_fm.1} parent=1 // loop_pre_header
      _
    $region3: #{simple_model_forward_fm.1} parent=1 // loop_header
      %s13 = sphi 0, %s17
      %p14 = scmp.ge.s32.totalorder %s13, 5
      %s23 = sphi 0, %s25
      %s26 = sphi 0, %s23
      %s27 = sphi 0, %s26
      %s43 = sphi 0, %s27
      %s47 = sphi 0, %s47
      %s49 = sphi 0, %s47
      %s50 = sphi 0, %s49
      %s64 = sphi 0, %s50
      %s68 = sphi 0, %s68
      %s70 = sphi 0, %s68
      %s71 = sphi 0, %s70
      %s85 = sphi 0, %s71
      %s89 = sphi 0, %s89
      %s91 = sphi 0, %s89
      %s92 = sphi 0, %s91
      %s106 = sphi 0, %s92
      %s110 = sphi 0, %s110
      %s112 = sphi 0, %s110
      %s113 = sphi 0, %s112
      %s127 = sphi 0, %s113
      %s131 = sphi 0, %s131
      %s133 = sphi 0, %s131
      %s134 = sphi 0, %s133
      %s148 = sphi 0, %s134
      %s152 = sphi 0, %s152
      %s154 = sphi 0, %s152
      %s155 = sphi 0, %s154
      %s169 = sphi 0, %s155
      %s175 = sphi 0, %s177
      %s178 = sphi 0, %s175
      %s179 = sphi 0, %s178
      %s195 = sphi 0, %s179
    $region4: #{simple_model_forward_fm.1} parent=1 // loop_header_branch
      %16 = sbr.rel (%p14) target = $region8
    $region5: #{simple_model_forward_fm.1} parent=1 // loop_body
      %s18 = ssub.s32 %s13, 1
      %s19 = ssub.s32 %s13, 2
      %s20 = sadd.s32 %s13, 1
      %s21 = ssub.s32 %s13, %s20
      %p22 = scmp.eq.s32.totalorder %s21, 0
      %s24 = sadd.s32 %s23, 1
      %s25 = scalar_select %p22, %s23, %s24
      %p28 = pneg %p22
      %p29 = scmp.eq.s32.totalorder %s13, 2
      %p30 = por %p28, %p29
      %p31 = scmp.ne.s32.totalorder %s23, %s26
      %p32 = scmp.eq.s32.totalorder %s13, 0
      %p33 = por %p31, %p32
      %p34 = scmp.ne.s32.totalorder %s23, %s26
      %p35 = scmp.eq.s32.totalorder %s18, 2
      %p36 = por %p34, %p35
      %p37 = scmp.ne.s32.totalorder %s26, %s27
      %p38 = scmp.eq.s32.totalorder %s18, 0
      %p39 = por %p37, %p38
      %p40 = scmp.ne.s32.totalorder %s26, %s27
      %p41 = scmp.eq.s32.totalorder %s19, 2
      %p42 = por %p40, %p41
      %p44 = scmp.ne.s32.totalorder %s27, %s43
      %p45 = scmp.eq.s32.totalorder %s19, 0
      %p46 = por %p44, %p45
      %s48 = sadd.s32 %s47, 1
      %p51 = scmp.eq.s32.totalorder %s13, 2
      %p52 = scmp.ne.s32.totalorder %s47, %s49
      %p53 = scmp.eq.s32.totalorder %s13, 0
      %p54 = por %p52, %p53
      %p55 = scmp.ne.s32.totalorder %s47, %s49
      %p56 = scmp.eq.s32.totalorder %s18, 2
      %p57 = por %p55, %p56
      %p58 = scmp.ne.s32.totalorder %s49, %s50
      %p59 = scmp.eq.s32.totalorder %s18, 0
      %p60 = por %p58, %p59
      %p61 = scmp.ne.s32.totalorder %s49, %s50
      %p62 = scmp.eq.s32.totalorder %s19, 2
      %p63 = por %p61, %p62
      %p65 = scmp.ne.s32.totalorder %s50, %s64
      %p66 = scmp.eq.s32.totalorder %s19, 0
      %p67 = por %p65, %p66
      %s69 = sadd.s32 %s68, 1
      %p72 = scmp.eq.s32.totalorder %s13, 2
      %p73 = scmp.ne.s32.totalorder %s68, %s70
      %p74 = scmp.eq.s32.totalorder %s13, 0
      %p75 = por %p73, %p74
      %p76 = scmp.ne.s32.totalorder %s68, %s70
      %p77 = scmp.eq.s32.totalorder %s18, 2
      %p78 = por %p76, %p77
      %p79 = scmp.ne.s32.totalorder %s70, %s71
      %p80 = scmp.eq.s32.totalorder %s18, 0
      %p81 = por %p79, %p80
      %p82 = scmp.ne.s32.totalorder %s70, %s71
      %p83 = scmp.eq.s32.totalorder %s19, 2
      %p84 = por %p82, %p83
      %p86 = scmp.ne.s32.totalorder %s71, %s85
      %p87 = scmp.eq.s32.totalorder %s19, 0
      %p88 = por %p86, %p87
      %s90 = sadd.s32 %s89, 1
      %p93 = scmp.eq.s32.totalorder %s13, 2
      %p94 = scmp.ne.s32.totalorder %s89, %s91
      %p95 = scmp.eq.s32.totalorder %s13, 0
      %p96 = por %p94, %p95
      %p97 = scmp.ne.s32.totalorder %s89, %s91
      %p98 = scmp.eq.s32.totalorder %s18, 2
      %p99 = por %p97, %p98
      %p100 = scmp.ne.s32.totalorder %s91, %s92
      %p101 = scmp.eq.s32.totalorder %s18, 0
      %p102 = por %p100, %p101
      %p103 = scmp.ne.s32.totalorder %s91, %s92
      %p104 = scmp.eq.s32.totalorder %s19, 2
      %p105 = por %p103, %p104
      %p107 = scmp.ne.s32.totalorder %s92, %s106
      %p108 = scmp.eq.s32.totalorder %s19, 0
      %p109 = por %p107, %p108
      %s111 = sadd.s32 %s110, 1
      %p114 = scmp.eq.s32.totalorder %s13, 2
      %p115 = scmp.ne.s32.totalorder %s110, %s112
      %p116 = scmp.eq.s32.totalorder %s13, 0
      %p117 = por %p115, %p116
      %p118 = scmp.ne.s32.totalorder %s110, %s112
      %p119 = scmp.eq.s32.totalorder %s18, 2
      %p120 = por %p118, %p119
      %p121 = scmp.ne.s32.totalorder %s112, %s113
      %p122 = scmp.eq.s32.totalorder %s18, 0
      %p123 = por %p121, %p122
      %p124 = scmp.ne.s32.totalorder %s112, %s113
      %p125 = scmp.eq.s32.totalorder %s19, 2
      %p126 = por %p124, %p125
      %p128 = scmp.ne.s32.totalorder %s113, %s127
      %p129 = scmp.eq.s32.totalorder %s19, 0
      %p130 = por %p128, %p129
      %s132 = sadd.s32 %s131, 1
      %p135 = scmp.eq.s32.totalorder %s13, 2
      %p136 = scmp.ne.s32.totalorder %s131, %s133
      %p137 = scmp.eq.s32.totalorder %s13, 0
      %p138 = por %p136, %p137
      %p139 = scmp.ne.s32.totalorder %s131, %s133
      %p140 = scmp.eq.s32.totalorder %s18, 2
      %p141 = por %p139, %p140
      %p142 = scmp.ne.s32.totalorder %s133, %s134
      %p143 = scmp.eq.s32.totalorder %s18, 0
      %p144 = por %p142, %p143
      %p145 = scmp.ne.s32.totalorder %s133, %s134
      %p146 = scmp.eq.s32.totalorder %s19, 2
      %p147 = por %p145, %p146
      %p149 = scmp.ne.s32.totalorder %s134, %s148
      %p150 = scmp.eq.s32.totalorder %s19, 0
      %p151 = por %p149, %p150
      %s153 = sadd.s32 %s152, 1
      %p156 = scmp.eq.s32.totalorder %s13, 2
      %p157 = scmp.ne.s32.totalorder %s152, %s154
      %p158 = scmp.eq.s32.totalorder %s13, 0
      %p159 = por %p157, %p158
      %p160 = scmp.ne.s32.totalorder %s152, %s154
      %p161 = scmp.eq.s32.totalorder %s18, 2
      %p162 = por %p160, %p161
      %p163 = scmp.ne.s32.totalorder %s154, %s155
      %p164 = scmp.eq.s32.totalorder %s18, 0
      %p165 = por %p163, %p164
      %p166 = scmp.ne.s32.totalorder %s154, %s155
      %p167 = scmp.eq.s32.totalorder %s19, 2
      %p168 = por %p166, %p167
      %p170 = scmp.ne.s32.totalorder %s155, %s169
      %p171 = scmp.eq.s32.totalorder %s19, 0
      %p172 = por %p170, %p171
      %s173 = ssub.s32 %s13, %s20
      %p174 = scmp.eq.s32.totalorder %s173, 0
      %s176 = sadd.s32 %s175, 1
      %s177 = scalar_select %p174, %s175, %s176
      %p180 = pneg %p174
      %p181 = scmp.eq.s32.totalorder %s13, 2
      %p182 = por %p180, %p181
      %p183 = scmp.ne.s32.totalorder %s175, %s178
      %p184 = scmp.eq.s32.totalorder %s13, 0
      %p185 = por %p183, %p184
      %p186 = scmp.ne.s32.totalorder %s175, %s178
      %p187 = scmp.eq.s32.totalorder %s18, 2
      %p188 = por %p186, %p187
      %p189 = scmp.ne.s32.totalorder %s178, %s179
      %p190 = scmp.eq.s32.totalorder %s18, 0
      %p191 = por %p189, %p190
      %p192 = scmp.ne.s32.totalorder %s178, %s179
      %p193 = scmp.eq.s32.totalorder %s19, 2
      %p194 = por %p192, %p193
      %p196 = scmp.ne.s32.totalorder %s179, %s195
      %p197 = scmp.eq.s32.totalorder %s19, 0
      %p198 = por %p196, %p197
      %p199 = scmp.le.s32.totalorder 1, %s13
      %p200 = scmp.lt.s32.totalorder %s13, 4
      %p201 = pnand %p199, %p200
      %p202 = pneg %p201
      // Predicated region
      $region9: #{simple_model_forward_fm.1} parent=5 // pred_check
        _
      $region10: #{simple_model_forward_fm.1} parent=5 // pred_check_branch
        %204 = sbr.rel (%p201) target = $region12
      $region11: #{simple_model_forward_fm.1} parent=5 // pred_region
        %s205 = ssub.s32 %s13, 1
        // Predicated region
        $region13: #{simple_model_forward_fm.1} parent=11 // pred_check
          %p206 = pneg %p60
        $region14: #{simple_model_forward_fm.1} parent=11 // pred_check_branch
          %208 = sbr.rel (%p206) target = $region16
        $region15: #{simple_model_forward_fm.1} parent=11 // pred_region
          _
        $region16: #{simple_model_forward_fm.1} parent=11 // pred_fallthru
          _
        // Predicated region
        $region17: #{simple_model_forward_fm.1} parent=11 // pred_check
          %p209 = pneg %p81
        $region18: #{simple_model_forward_fm.1} parent=11 // pred_check_branch
          %211 = sbr.rel (%p209) target = $region20
        $region19: #{simple_model_forward_fm.1} parent=11 // pred_region
          _
        $region20: #{simple_model_forward_fm.1} parent=11 // pred_fallthru
          _
        // Predicated region
        $region21: #{simple_model_forward_fm.1} parent=11 // pred_check
          %p212 = pneg %p102
        $region22: #{simple_model_forward_fm.1} parent=11 // pred_check_branch
          %214 = sbr.rel (%p212) target = $region24
        $region23: #{simple_model_forward_fm.1} parent=11 // pred_region
          _
        $region24: #{simple_model_forward_fm.1} parent=11 // pred_fallthru
          _
        // Predicated region
        $region25: #{simple_model_forward_fm.1} parent=11 // pred_check
          %p215 = pneg %p123
        $region26: #{simple_model_forward_fm.1} parent=11 // pred_check_branch
          %217 = sbr.rel (%p215) target = $region28
        $region27: #{simple_model_forward_fm.1} parent=11 // pred_region
          _
        $region28: #{simple_model_forward_fm.1} parent=11 // pred_fallthru
          _
        // Predicated region
        $region29: #{simple_model_forward_fm.1} parent=11 // pred_check
          %p218 = pneg %p144
        $region30: #{simple_model_forward_fm.1} parent=11 // pred_check_branch
          %220 = sbr.rel (%p218) target = $region32
        $region31: #{simple_model_forward_fm.1} parent=11 // pred_region
          _
        $region32: #{simple_model_forward_fm.1} parent=11 // pred_fallthru
          _
        // Predicated region
        $region33: #{simple_model_forward_fm.1} parent=11 // pred_check
          %p221 = pneg %p165
        $region34: #{simple_model_forward_fm.1} parent=11 // pred_check_branch
          %223 = sbr.rel (%p221) target = $region36
        $region35: #{simple_model_forward_fm.1} parent=11 // pred_region
          _
        $region36: #{simple_model_forward_fm.1} parent=11 // pred_fallthru
          _
      $region12: #{simple_model_forward_fm.1} parent=5 // pred_fallthru
        _
      %p224 = scmp.lt.s32.totalorder %s13, 3
      // Predicated region
      $region37: #{simple_model_forward_fm.1} parent=5 // pred_check
        %p225 = pneg %p224
      $region38: #{simple_model_forward_fm.1} parent=5 // pred_check_branch
        %227 = sbr.rel (%p225) target = $region40
      $region39: #{simple_model_forward_fm.1} parent=5 // pred_region
        // Predicated region
        $region41: #{simple_model_forward_fm.1} parent=39 // pred_check
          %p228 = pneg %p33
        $region42: #{simple_model_forward_fm.1} parent=39 // pred_check_branch
          %230 = sbr.rel (%p228) target = $region44
        $region43: #{simple_model_forward_fm.1} parent=39 // pred_region
          %s231 = sand.u32 %s23, 1
          %s232 = sand.u32 %s23, 1
          %s233 = smul.addr %s232, 48
          %s234 = scalar_lea.vmem [#allocation2], %s233
          %s235 = smul.addr %s13, 2
          %s236 = smul.addr %s235, 8
          %s237 = scalar_lea.vmem %s0, %s236
          // Predicated region
          $region45: #{simple_model_forward_fm.1} parent=43 // pred_check
            _
          $region46: #{simple_model_forward_fm.1} parent=43 // pred_check_branch
            %239 = sbr.rel (0) target = $region48
          $region47: #{simple_model_forward_fm.1} parent=43 // pred_region
            // Predicated region
            $region49: #{simple_model_forward_fm.1} parent=47 // pred_check
              _
            $region50: #{simple_model_forward_fm.1} parent=47 // pred_check_branch
              %241 = sbr.rel (0) target = $region52
            $region51: #{simple_model_forward_fm.1} parent=47 // pred_region
              loop: start=0, step=1, limit=1
              $region53: #{simple_model_forward_fm.1} parent=51 // loop_pre_header
                _
              $region54: #{simple_model_forward_fm.1} parent=51 // loop_header
                %s243 = sphi 0, %s247
                %p244 = scmp.ge.s32.totalorder %s243, 1
                %s248 = sphi %s237, %s237
                %s249 = sphi %s234, %s234
              $region55: #{simple_model_forward_fm.1} parent=51 // loop_header_branch
                %246 = sbr.rel (%p244) target = $region59
              $region56: #{simple_model_forward_fm.1} parent=51 // loop_body
                %v250 = vld [vmem:[%s248] sm:$0xff]
                %251 = vst [vmem:[%s249] sm:$0xff] %v250
                %v252 = vld [vmem:[%s248 + $0x8] sm:$0xff]
                %253 = vst [vmem:[%s249 + $0x8] sm:$0xff] %v252
                %v254 = vld [vmem:[%s248 + $0x30] sm:$0xff]
                %255 = vst [vmem:[%s249 + $0x10] sm:$0xff] %v254
                %v256 = vld [vmem:[%s248 + $0x38] sm:$0xff]
                %257 = vst [vmem:[%s249 + $0x18] sm:$0xff] %v256
                %v258 = vld [vmem:[%s248 + $0x60] sm:$0xff]
                %259 = vst [vmem:[%s249 + $0x20] sm:$0xff] %v258
                %v260 = vld [vmem:[%s248 + $0x68] sm:$0xff]
                %261 = vst [vmem:[%s249 + $0x28] sm:$0xff] %v260
              $region57: #{simple_model_forward_fm.1} parent=51 // loop_footer
                %s247 = sadd.s32 1, %s243
              $region58: #{simple_model_forward_fm.1} parent=51 // loop_footer_branch
                %242 = sbr.rel target = $region54
              $region59: #{simple_model_forward_fm.1} parent=51 // loop_exit
                _
            $region52: #{simple_model_forward_fm.1} parent=47 // pred_fallthru
              _
            // Predicated region
            $region60: #{simple_model_forward_fm.1} parent=47 // pred_check
              _
            $region61: #{simple_model_forward_fm.1} parent=47 // pred_check_branch
              %263 = sbr.rel target = $region63
            $region62: #{simple_model_forward_fm.1} parent=47 // pred_region
              _
            $region63: #{simple_model_forward_fm.1} parent=47 // pred_fallthru
              _
          $region48: #{simple_model_forward_fm.1} parent=43 // pred_fallthru
            _
          %264 = vnop
        $region44: #{simple_model_forward_fm.1} parent=39 // pred_fallthru
          _
      $region40: #{simple_model_forward_fm.1} parent=5 // pred_fallthru
        _
      %p265 = scmp.le.s32.totalorder 1, %s13
      %p266 = scmp.lt.s32.totalorder %s13, 4
      %p267 = pnand %p265, %p266
      %p268 = pneg %p267
      // Predicated region
      $region64: #{simple_model_forward_fm.1} parent=5 // pred_check
        _
      $region65: #{simple_model_forward_fm.1} parent=5 // pred_check_branch
        %270 = sbr.rel (%p267) target = $region67
      $region66: #{simple_model_forward_fm.1} parent=5 // pred_region
        %s271 = ssub.s32 %s13, 1
        %s272 = sand.u32 %s26, 1
        %s273 = sand.u32 %s26, 1
        %s274 = smul.addr %s273, 48
        %s275 = scalar_lea.vmem [#allocation2], %s274
        // Predicated region
        $region68: #{simple_model_forward_fm.1} parent=66 // pred_check
          %p276 = pneg %p39
        $region69: #{simple_model_forward_fm.1} parent=66 // pred_check_branch
          %278 = sbr.rel (%p276) target = $region71
        $region70: #{simple_model_forward_fm.1} parent=66 // pred_region
          _
        $region71: #{simple_model_forward_fm.1} parent=66 // pred_fallthru
          _
        %s279 = sand.u32 %s26, 1
        %s280 = sand.u32 %s26, 1
        %s281 = smul.addr %s280, 48
        %s282 = scalar_lea.vmem [#allocation2], %s281
        %p283 = pneg %p39
        %p284 = pneg %p36
        %p285 = pneg %p60
        %p286 = pneg %p57
        %p287 = pneg %p81
        %p288 = pneg %p78
        %p289 = pneg %p102
        %p290 = pneg %p99
        %p291 = pneg %p123
        %p292 = pneg %p120
        %p293 = pneg %p144
        %p294 = pneg %p141
        %p295 = pneg %p165
        %p296 = pneg %p162
        %p297 = pneg %p191
        %p298 = pneg %p188
        %s299 = sand.u32 %s178, 1
        %s300 = sand.u32 %s178, 1
        %s301 = smul.addr %s300, 32
        %s302 = scalar_lea.vmem [#allocation3], %s301
        %s303 = smul.u32 %s18, 8
        %s304 = ssub.s32 20, %s303
        %p305 = scmp.lt.s32.totalorder %s304, 8
        %s306 = scalar_select %p305, %s304, 8
        // While loop
        $region72: #{simple_model_forward_fm.1} parent=66 // loop_pre_header
          _
        $region73: #{simple_model_forward_fm.1} parent=66 // loop_header
          %s308 = sphi 0, %s310
          %p309 = scmp.ge.s32.totalorder %s308, %s306
        $region74: #{simple_model_forward_fm.1} parent=66 // loop_header_branch
          %312 = sbr.rel (%p309) target = $region78
        $region75: #{simple_model_forward_fm.1} parent=66 // loop_body
          %s313 = sshra.s32 %s308, 3
          %s314 = sand.u32 %s308, 7
          %s315 = sshra.s32 %s308, 3
          %s316 = sand.u32 %s308, 7
          %s317 = smul.u32 %s313, 2
          %s318 = smul.u32 %s317, 8
          %s319 = sadd.s32 %s318, %s316
          %s320 = scalar_lea.vmem %s275, %s319 [#allocation2]
          %v321 = vld [vmem:[%s320] ss:$8 sm:$0x3]
          %s322 = sadd.s32 16, %s319
          %s323 = scalar_lea.vmem %s275, %s322 [#allocation2]
          %v324 = vld [vmem:[%s323] ss:$8 sm:$0x3]
          %s325 = sadd.s32 32, %s319
          %s326 = scalar_lea.vmem %s275, %s325 [#allocation2]
          %v327 = vld [vmem:[%s326] ss:$8 sm:$0x3]
          %v328 = vld [vmem:[%s2] sm:$0xff]
          %v329 = vld [vmem:[%s2 + $0x8] sm:$0xff]
          %v330 = vld [vmem:[%s1] sm:$0xff]
          %v331 = vld [vmem:[%s1 + $0x8] sm:$0xff]
          %v333 = vlaneseq
          %v334 = vshrl.u32 %v333, 7
          %v335 = vsub.s32 0, %v334
          %v336 = vrot.slane %v321, %v335
          %v337 = vlaneseq
          %v338 = vshrl.u32 %v337, 7
          %v339 = vsub.s32 1, %v338
          %v340 = vrot.slane %v321, %v339
          %v343 = vmul.f32 %v330, %v336
          %v344 = vmul.f32 %v331, %v340
          %v345 = vadd.f32 %v328, %v343
          %v346 = vadd.f32 %v329, %v344
          %s347 = scalar_lea.vmem %s1, 16
          %v348 = vld [vmem:[%s347] sm:$0xff]
          %v349 = vld [vmem:[%s347 + $0x8] sm:$0xff]
          %v351 = vlaneseq
          %v352 = vshrl.u32 %v351, 7
          %v353 = vsub.s32 0, %v352
          %v354 = vrot.slane %v324, %v353
          %v355 = vlaneseq
          %v356 = vshrl.u32 %v355, 7
          %v357 = vsub.s32 1, %v356
          %v358 = vrot.slane %v324, %v357
          %v361 = vmul.f32 %v348, %v354
          %v362 = vmul.f32 %v349, %v358
          %v363 = vadd.f32 %v345, %v361
          %v364 = vadd.f32 %v346, %v362
          %s365 = scalar_lea.vmem %s1, 32
          %v366 = vld [vmem:[%s365] sm:$0xff]
          %v367 = vld [vmem:[%s365 + $0x8] sm:$0xff]
          %v369 = vlaneseq
          %v370 = vshrl.u32 %v369, 7
          %v371 = vsub.s32 0, %v370
          %v372 = vrot.slane %v327, %v371
          %v373 = vlaneseq
          %v374 = vshrl.u32 %v373, 7
          %v375 = vsub.s32 1, %v374
          %v376 = vrot.slane %v327, %v375
          %v379 = vmul.f32 %v366, %v372
          %v380 = vmul.f32 %v367, %v376
          %v381 = vadd.f32 %v363, %v379
          %v382 = vadd.f32 %v364, %v380
          %v383 = vmax.f32 %v381, 0.0
          %v384 = vmax.f32 %v382, 0.0
          %v385 = vld [vmem:[%s4] sm:$0xff]
          %v386 = vld [vmem:[%s4 + $0x8] sm:$0xff]
          %v387 = vld [vmem:[%s4 + $0x10] sm:$0xff]
          %v388 = vld [vmem:[%s4 + $0x18] sm:$0xff]
          %v389 = vld [vmem:[%s3] sm:$0xff]
          %v390 = vld [vmem:[%s3 + $0x8] sm:$0xff]
          %v391 = vld [vmem:[%s3 + $0x10] sm:$0xff]
          %v392 = vld [vmem:[%s3 + $0x18] sm:$0xff]
          %v393 = vlaneseq
          %v394 = vshrl.u32 %v393, 7
          %v395 = vsub.s32 0, %v394
          %v396 = vrot.slane %v383, %v395
          %v397 = vlaneseq
          %v398 = vshrl.u32 %v397, 7
          %v399 = vsub.s32 0, %v398
          %v400 = vrot.slane %v384, %v399
          %v401 = vmul.f32 %v389, %v396
          %v402 = vmul.f32 %v390, %v400
          %v403 = vmul.f32 %v391, %v396
          %v404 = vmul.f32 %v392, %v400
          %v405 = vadd.f32 %v385, %v401
          %v406 = vadd.f32 %v386, %v402
          %v407 = vadd.f32 %v387, %v403
          %v408 = vadd.f32 %v388, %v404
          %s409 = scalar_lea.vmem %s3, 32
          %v410 = vld [vmem:[%s409] sm:$0xff]
          %v411 = vld [vmem:[%s409 + $0x8] sm:$0xff]
          %v412 = vld [vmem:[%s409 + $0x10] sm:$0xff]
          %v413 = vld [vmem:[%s409 + $0x18] sm:$0xff]
          %v414 = vlaneseq
          %v415 = vshrl.u32 %v414, 7
          %v416 = vsub.s32 1, %v415
          %v417 = vrot.slane %v383, %v416
          %v418 = vlaneseq
          %v419 = vshrl.u32 %v418, 7
          %v420 = vsub.s32 1, %v419
          %v421 = vrot.slane %v384, %v420
          %v422 = vmul.f32 %v410, %v417
          %v423 = vmul.f32 %v411, %v421
          %v424 = vmul.f32 %v412, %v417
          %v425 = vmul.f32 %v413, %v421
          %v426 = vadd.f32 %v405, %v422
          %v427 = vadd.f32 %v406, %v423
          %v428 = vadd.f32 %v407, %v424
          %v429 = vadd.f32 %v408, %v425
          %s430 = scalar_lea.vmem %s3, 64
          %v431 = vld [vmem:[%s430] sm:$0xff]
          %v432 = vld [vmem:[%s430 + $0x8] sm:$0xff]
          %v433 = vld [vmem:[%s430 + $0x10] sm:$0xff]
          %v434 = vld [vmem:[%s430 + $0x18] sm:$0xff]
          %v435 = vlaneseq
          %v436 = vshrl.u32 %v435, 7
          %v437 = vsub.s32 2, %v436
          %v438 = vrot.slane %v383, %v437
          %v439 = vlaneseq
          %v440 = vshrl.u32 %v439, 7
          %v441 = vsub.s32 2, %v440
          %v442 = vrot.slane %v384, %v441
          %v443 = vmul.f32 %v431, %v438
          %v444 = vmul.f32 %v432, %v442
          %v445 = vmul.f32 %v433, %v438
          %v446 = vmul.f32 %v434, %v442
          %v447 = vadd.f32 %v426, %v443
          %v448 = vadd.f32 %v427, %v444
          %v449 = vadd.f32 %v428, %v445
          %v450 = vadd.f32 %v429, %v446
          %s451 = scalar_lea.vmem %s3, 96
          %v452 = vld [vmem:[%s451] sm:$0xff]
          %v453 = vld [vmem:[%s451 + $0x8] sm:$0xff]
          %v454 = vld [vmem:[%s451 + $0x10] sm:$0xff]
          %v455 = vld [vmem:[%s451 + $0x18] sm:$0xff]
          %v456 = vlaneseq
          %v457 = vshrl.u32 %v456, 7
          %v458 = vsub.s32 3, %v457
          %v459 = vrot.slane %v383, %v458
          %v460 = vlaneseq
          %v461 = vshrl.u32 %v460, 7
          %v462 = vsub.s32 3, %v461
          %v463 = vrot.slane %v384, %v462
          %v464 = vmul.f32 %v452, %v459
          %v465 = vmul.f32 %v453, %v463
          %v466 = vmul.f32 %v454, %v459
          %v467 = vmul.f32 %v455, %v463
          %v468 = vadd.f32 %v447, %v464
          %v469 = vadd.f32 %v448, %v465
          %v470 = vadd.f32 %v449, %v466
          %v471 = vadd.f32 %v450, %v467
          %s472 = scalar_lea.vmem %s3, 128
          %v473 = vld [vmem:[%s472] sm:$0xff]
          %v474 = vld [vmem:[%s472 + $0x8] sm:$0xff]
          %v475 = vld [vmem:[%s472 + $0x10] sm:$0xff]
          %v476 = vld [vmem:[%s472 + $0x18] sm:$0xff]
          %v477 = vlaneseq
          %v478 = vshrl.u32 %v477, 7
          %v479 = vsub.s32 4, %v478
          %v480 = vrot.slane %v383, %v479
          %v481 = vlaneseq
          %v482 = vshrl.u32 %v481, 7
          %v483 = vsub.s32 4, %v482
          %v484 = vrot.slane %v384, %v483
          %v485 = vmul.f32 %v473, %v480
          %v486 = vmul.f32 %v474, %v484
          %v487 = vmul.f32 %v475, %v480
          %v488 = vmul.f32 %v476, %v484
          %v489 = vadd.f32 %v468, %v485
          %v490 = vadd.f32 %v469, %v486
          %v491 = vadd.f32 %v470, %v487
          %v492 = vadd.f32 %v471, %v488
          %s493 = scalar_lea.vmem %s3, 160
          %v494 = vld [vmem:[%s493] sm:$0xff]
          %v495 = vld [vmem:[%s493 + $0x8] sm:$0xff]
          %v496 = vld [vmem:[%s493 + $0x10] sm:$0xff]
          %v497 = vld [vmem:[%s493 + $0x18] sm:$0xff]
          %v498 = vlaneseq
          %v499 = vshrl.u32 %v498, 7
          %v500 = vsub.s32 5, %v499
          %v501 = vrot.slane %v383, %v500
          %v502 = vlaneseq
          %v503 = vshrl.u32 %v502, 7
          %v504 = vsub.s32 5, %v503
          %v505 = vrot.slane %v384, %v504
          %v506 = vmul.f32 %v494, %v501
          %v507 = vmul.f32 %v495, %v505
          %v508 = vmul.f32 %v496, %v501
          %v509 = vmul.f32 %v497, %v505
          %v510 = vadd.f32 %v489, %v506
          %v511 = vadd.f32 %v490, %v507
          %v512 = vadd.f32 %v491, %v508
          %v513 = vadd.f32 %v492, %v509
          %s514 = scalar_lea.vmem %s3, 192
          %v515 = vld [vmem:[%s514] sm:$0xff]
          %v516 = vld [vmem:[%s514 + $0x8] sm:$0xff]
          %v517 = vld [vmem:[%s514 + $0x10] sm:$0xff]
          %v518 = vld [vmem:[%s514 + $0x18] sm:$0xff]
          %v519 = vlaneseq
          %v520 = vshrl.u32 %v519, 7
          %v521 = vsub.s32 6, %v520
          %v522 = vrot.slane %v383, %v521
          %v523 = vlaneseq
          %v524 = vshrl.u32 %v523, 7
          %v525 = vsub.s32 6, %v524
          %v526 = vrot.slane %v384, %v525
          %v527 = vmul.f32 %v515, %v522
          %v528 = vmul.f32 %v516, %v526
          %v529 = vmul.f32 %v517, %v522
          %v530 = vmul.f32 %v518, %v526
          %v531 = vadd.f32 %v510, %v527
          %v532 = vadd.f32 %v511, %v528
          %v533 = vadd.f32 %v512, %v529
          %v534 = vadd.f32 %v513, %v530
          %s535 = scalar_lea.vmem %s3, 224
          %v536 = vld [vmem:[%s535] sm:$0xff]
          %v537 = vld [vmem:[%s535 + $0x8] sm:$0xff]
          %v538 = vld [vmem:[%s535 + $0x10] sm:$0xff]
          %v539 = vld [vmem:[%s535 + $0x18] sm:$0xff]
          %v540 = vlaneseq
          %v541 = vshrl.u32 %v540, 7
          %v542 = vsub.s32 7, %v541
          %v543 = vrot.slane %v383, %v542
          %v544 = vlaneseq
          %v545 = vshrl.u32 %v544, 7
          %v546 = vsub.s32 7, %v545
          %v547 = vrot.slane %v384, %v546
          %v548 = vmul.f32 %v536, %v543
          %v549 = vmul.f32 %v537, %v547
          %v550 = vmul.f32 %v538, %v543
          %v551 = vmul.f32 %v539, %v547
          %v552 = vadd.f32 %v531, %v548
          %v553 = vadd.f32 %v532, %v549
          %v554 = vadd.f32 %v533, %v550
          %v555 = vadd.f32 %v534, %v551
          %v556 = vmax.f32 %v552, 0.0
          %v557 = vmax.f32 %v553, 0.0
          %v558 = vmax.f32 %v554, 0.0
          %v559 = vmax.f32 %v555, 0.0
          %v560 = vld [vmem:[%s6] sm:$0xf]
          %v561 = vld [vmem:[%s5] sm:$0xf]
          %v562 = vlaneseq
          %v563 = vshrl.u32 %v562, 7
          %v564 = vsub.s32 0, %v563
          %v565 = vrot.slane %v556, %v564
          %v566 = vlaneseq
          %v567 = vshrl.u32 %v566, 7
          %v568 = vsub.s32 0, %v567
          %v569 = vrot.slane %v557, %v568
          %v572 = vcombine.low %v565, %v569
          %v574 = vunpack.c.l.s4 1983009808
          %v575 = vunpack.c.0.s8 %v574
          %v576 = vlaneseq
          %v577 = vshrl.u32 %v576, 7
          %v578 = vsub.s32 %v575, %v577
          %v579 = vrot.slane %v572, %v578
          %v581 = vmul.f32 %v561, %v579
          %v582 = vadd.f32 %v560, %v581
          %s583 = scalar_lea.vmem %s5, 4
          %v584 = vld [vmem:[%s583] sm:$0xf]
          %v585 = vlaneseq
          %v586 = vshrl.u32 %v585, 7
          %v587 = vsub.s32 1, %v586
          %v588 = vrot.slane %v556, %v587
          %v589 = vlaneseq
          %v590 = vshrl.u32 %v589, 7
          %v591 = vsub.s32 1, %v590
          %v592 = vrot.slane %v557, %v591
          %v595 = vcombine.low %v588, %v592
          %v597 = vunpack.c.l.s4 1983009808
          %v598 = vunpack.c.0.s8 %v597
          %v599 = vlaneseq
          %v600 = vshrl.u32 %v599, 7
          %v601 = vsub.s32 %v598, %v600
          %v602 = vrot.slane %v595, %v601
          %v604 = vmul.f32 %v584, %v602
          %v605 = vadd.f32 %v582, %v604
          %s606 = scalar_lea.vmem %s5, 8
          %v607 = vld [vmem:[%s606] sm:$0xf]
          %v608 = vlaneseq
          %v609 = vshrl.u32 %v608, 7
          %v610 = vsub.s32 2, %v609
          %v611 = vrot.slane %v556, %v610
          %v612 = vlaneseq
          %v613 = vshrl.u32 %v612, 7
          %v614 = vsub.s32 2, %v613
          %v615 = vrot.slane %v557, %v614
          %v618 = vcombine.low %v611, %v615
          %v620 = vunpack.c.l.s4 1983009808
          %v621 = vunpack.c.0.s8 %v620
          %v622 = vlaneseq
          %v623 = vshrl.u32 %v622, 7
          %v624 = vsub.s32 %v621, %v623
          %v625 = vrot.slane %v618, %v624
          %v627 = vmul.f32 %v607, %v625
          %v628 = vadd.f32 %v605, %v627
          %s629 = scalar_lea.vmem %s5, 12
          %v630 = vld [vmem:[%s629] sm:$0xf]
          %v631 = vlaneseq
          %v632 = vshrl.u32 %v631, 7
          %v633 = vsub.s32 3, %v632
          %v634 = vrot.slane %v556, %v633
          %v635 = vlaneseq
          %v636 = vshrl.u32 %v635, 7
          %v637 = vsub.s32 3, %v636
          %v638 = vrot.slane %v557, %v637
          %v641 = vcombine.low %v634, %v638
          %v643 = vunpack.c.l.s4 1983009808
          %v644 = vunpack.c.0.s8 %v643
          %v645 = vlaneseq
          %v646 = vshrl.u32 %v645, 7
          %v647 = vsub.s32 %v644, %v646
          %v648 = vrot.slane %v641, %v647
          %v650 = vmul.f32 %v630, %v648
          %v651 = vadd.f32 %v628, %v650
          %s652 = scalar_lea.vmem %s5, 16
          %v653 = vld [vmem:[%s652] sm:$0xf]
          %v654 = vlaneseq
          %v655 = vshrl.u32 %v654, 7
          %v656 = vsub.s32 4, %v655
          %v657 = vrot.slane %v556, %v656
          %v658 = vlaneseq
          %v659 = vshrl.u32 %v658, 7
          %v660 = vsub.s32 4, %v659
          %v661 = vrot.slane %v557, %v660
          %v664 = vcombine.low %v657, %v661
          %v666 = vunpack.c.l.s4 1983009808
          %v667 = vunpack.c.0.s8 %v666
          %v668 = vlaneseq
          %v669 = vshrl.u32 %v668, 7
          %v670 = vsub.s32 %v667, %v669
          %v671 = vrot.slane %v664, %v670
          %v673 = vmul.f32 %v653, %v671
          %v674 = vadd.f32 %v651, %v673
          %s675 = scalar_lea.vmem %s5, 20
          %v676 = vld [vmem:[%s675] sm:$0xf]
          %v677 = vlaneseq
          %v678 = vshrl.u32 %v677, 7
          %v679 = vsub.s32 5, %v678
          %v680 = vrot.slane %v556, %v679
          %v681 = vlaneseq
          %v682 = vshrl.u32 %v681, 7
          %v683 = vsub.s32 5, %v682
          %v684 = vrot.slane %v557, %v683
          %v687 = vcombine.low %v680, %v684
          %v689 = vunpack.c.l.s4 1983009808
          %v690 = vunpack.c.0.s8 %v689
          %v691 = vlaneseq
          %v692 = vshrl.u32 %v691, 7
          %v693 = vsub.s32 %v690, %v692
          %v694 = vrot.slane %v687, %v693
          %v696 = vmul.f32 %v676, %v694
          %v697 = vadd.f32 %v674, %v696
          %s698 = scalar_lea.vmem %s5, 24
          %v699 = vld [vmem:[%s698] sm:$0xf]
          %v700 = vlaneseq
          %v701 = vshrl.u32 %v700, 7
          %v702 = vsub.s32 6, %v701
          %v703 = vrot.slane %v556, %v702
          %v704 = vlaneseq
          %v705 = vshrl.u32 %v704, 7
          %v706 = vsub.s32 6, %v705
          %v707 = vrot.slane %v557, %v706
          %v710 = vcombine.low %v703, %v707
          %v712 = vunpack.c.l.s4 1983009808
          %v713 = vunpack.c.0.s8 %v712
          %v714 = vlaneseq
          %v715 = vshrl.u32 %v714, 7
          %v716 = vsub.s32 %v713, %v715
          %v717 = vrot.slane %v710, %v716
          %v719 = vmul.f32 %v699, %v717
          %v720 = vadd.f32 %v697, %v719
          %s721 = scalar_lea.vmem %s5, 28
          %v722 = vld [vmem:[%s721] sm:$0xf]
          %v723 = vlaneseq
          %v724 = vshrl.u32 %v723, 7
          %v725 = vsub.s32 7, %v724
          %v726 = vrot.slane %v556, %v725
          %v727 = vlaneseq
          %v728 = vshrl.u32 %v727, 7
          %v729 = vsub.s32 7, %v728
          %v730 = vrot.slane %v557, %v729
          %v733 = vcombine.low %v726, %v730
          %v735 = vunpack.c.l.s4 1983009808
          %v736 = vunpack.c.0.s8 %v735
          %v737 = vlaneseq
          %v738 = vshrl.u32 %v737, 7
          %v739 = vsub.s32 %v736, %v738
          %v740 = vrot.slane %v733, %v739
          %v742 = vmul.f32 %v722, %v740
          %v743 = vadd.f32 %v720, %v742
          %s744 = scalar_lea.vmem %s5, 32
          %v745 = vld [vmem:[%s744] sm:$0xf]
          %v746 = vlaneseq
          %v747 = vshrl.u32 %v746, 7
          %v748 = vsub.s32 0, %v747
          %v749 = vrot.slane %v558, %v748
          %v750 = vlaneseq
          %v751 = vshrl.u32 %v750, 7
          %v752 = vsub.s32 0, %v751
          %v753 = vrot.slane %v559, %v752
          %v756 = vcombine.low %v749, %v753
          %v758 = vunpack.c.l.s4 1983009808
          %v759 = vunpack.c.0.s8 %v758
          %v760 = vlaneseq
          %v761 = vshrl.u32 %v760, 7
          %v762 = vsub.s32 %v759, %v761
          %v763 = vrot.slane %v756, %v762
          %v765 = vmul.f32 %v745, %v763
          %v766 = vadd.f32 %v743, %v765
          %s767 = scalar_lea.vmem %s5, 36
          %v768 = vld [vmem:[%s767] sm:$0xf]
          %v769 = vlaneseq
          %v770 = vshrl.u32 %v769, 7
          %v771 = vsub.s32 1, %v770
          %v772 = vrot.slane %v558, %v771
          %v773 = vlaneseq
          %v774 = vshrl.u32 %v773, 7
          %v775 = vsub.s32 1, %v774
          %v776 = vrot.slane %v559, %v775
          %v779 = vcombine.low %v772, %v776
          %v781 = vunpack.c.l.s4 1983009808
          %v782 = vunpack.c.0.s8 %v781
          %v783 = vlaneseq
          %v784 = vshrl.u32 %v783, 7
          %v785 = vsub.s32 %v782, %v784
          %v786 = vrot.slane %v779, %v785
          %v788 = vmul.f32 %v768, %v786
          %v789 = vadd.f32 %v766, %v788
          %s790 = scalar_lea.vmem %s5, 40
          %v791 = vld [vmem:[%s790] sm:$0xf]
          %v792 = vlaneseq
          %v793 = vshrl.u32 %v792, 7
          %v794 = vsub.s32 2, %v793
          %v795 = vrot.slane %v558, %v794
          %v796 = vlaneseq
          %v797 = vshrl.u32 %v796, 7
          %v798 = vsub.s32 2, %v797
          %v799 = vrot.slane %v559, %v798
          %v802 = vcombine.low %v795, %v799
          %v804 = vunpack.c.l.s4 1983009808
          %v805 = vunpack.c.0.s8 %v804
          %v806 = vlaneseq
          %v807 = vshrl.u32 %v806, 7
          %v808 = vsub.s32 %v805, %v807
          %v809 = vrot.slane %v802, %v808
          %v811 = vmul.f32 %v791, %v809
          %v812 = vadd.f32 %v789, %v811
          %s813 = scalar_lea.vmem %s5, 44
          %v814 = vld [vmem:[%s813] sm:$0xf]
          %v815 = vlaneseq
          %v816 = vshrl.u32 %v815, 7
          %v817 = vsub.s32 3, %v816
          %v818 = vrot.slane %v558, %v817
          %v819 = vlaneseq
          %v820 = vshrl.u32 %v819, 7
          %v821 = vsub.s32 3, %v820
          %v822 = vrot.slane %v559, %v821
          %v825 = vcombine.low %v818, %v822
          %v827 = vunpack.c.l.s4 1983009808
          %v828 = vunpack.c.0.s8 %v827
          %v829 = vlaneseq
          %v830 = vshrl.u32 %v829, 7
          %v831 = vsub.s32 %v828, %v830
          %v832 = vrot.slane %v825, %v831
          %v834 = vmul.f32 %v814, %v832
          %v835 = vadd.f32 %v812, %v834
          %s836 = scalar_lea.vmem %s5, 48
          %v837 = vld [vmem:[%s836] sm:$0xf]
          %v838 = vlaneseq
          %v839 = vshrl.u32 %v838, 7
          %v840 = vsub.s32 4, %v839
          %v841 = vrot.slane %v558, %v840
          %v842 = vlaneseq
          %v843 = vshrl.u32 %v842, 7
          %v844 = vsub.s32 4, %v843
          %v845 = vrot.slane %v559, %v844
          %v848 = vcombine.low %v841, %v845
          %v850 = vunpack.c.l.s4 1983009808
          %v851 = vunpack.c.0.s8 %v850
          %v852 = vlaneseq
          %v853 = vshrl.u32 %v852, 7
          %v854 = vsub.s32 %v851, %v853
          %v855 = vrot.slane %v848, %v854
          %v857 = vmul.f32 %v837, %v855
          %v858 = vadd.f32 %v835, %v857
          %s859 = scalar_lea.vmem %s5, 52
          %v860 = vld [vmem:[%s859] sm:$0xf]
          %v861 = vlaneseq
          %v862 = vshrl.u32 %v861, 7
          %v863 = vsub.s32 5, %v862
          %v864 = vrot.slane %v558, %v863
          %v865 = vlaneseq
          %v866 = vshrl.u32 %v865, 7
          %v867 = vsub.s32 5, %v866
          %v868 = vrot.slane %v559, %v867
          %v871 = vcombine.low %v864, %v868
          %v873 = vunpack.c.l.s4 1983009808
          %v874 = vunpack.c.0.s8 %v873
          %v875 = vlaneseq
          %v876 = vshrl.u32 %v875, 7
          %v877 = vsub.s32 %v874, %v876
          %v878 = vrot.slane %v871, %v877
          %v880 = vmul.f32 %v860, %v878
          %v881 = vadd.f32 %v858, %v880
          %s882 = scalar_lea.vmem %s5, 56
          %v883 = vld [vmem:[%s882] sm:$0xf]
          %v884 = vlaneseq
          %v885 = vshrl.u32 %v884, 7
          %v886 = vsub.s32 6, %v885
          %v887 = vrot.slane %v558, %v886
          %v888 = vlaneseq
          %v889 = vshrl.u32 %v888, 7
          %v890 = vsub.s32 6, %v889
          %v891 = vrot.slane %v559, %v890
          %v894 = vcombine.low %v887, %v891
          %v896 = vunpack.c.l.s4 1983009808
          %v897 = vunpack.c.0.s8 %v896
          %v898 = vlaneseq
          %v899 = vshrl.u32 %v898, 7
          %v900 = vsub.s32 %v897, %v899
          %v901 = vrot.slane %v894, %v900
          %v903 = vmul.f32 %v883, %v901
          %v904 = vadd.f32 %v881, %v903
          %s905 = scalar_lea.vmem %s5, 60
          %v906 = vld [vmem:[%s905] sm:$0xf]
          %v907 = vlaneseq
          %v908 = vshrl.u32 %v907, 7
          %v909 = vsub.s32 7, %v908
          %v910 = vrot.slane %v558, %v909
          %v911 = vlaneseq
          %v912 = vshrl.u32 %v911, 7
          %v913 = vsub.s32 7, %v912
          %v914 = vrot.slane %v559, %v913
          %v917 = vcombine.low %v910, %v914
          %v919 = vunpack.c.l.s4 1983009808
          %v920 = vunpack.c.0.s8 %v919
          %v921 = vlaneseq
          %v922 = vshrl.u32 %v921, 7
          %v923 = vsub.s32 %v920, %v922
          %v924 = vrot.slane %v917, %v923
          %v926 = vmul.f32 %v906, %v924
          %v927 = vadd.f32 %v904, %v926
          %v928 = vsub.f32 0.0, %v927
          %v929 = vmul.f32 %v928, 1.442695
          %v930 = vpow.pop %v929
          %v931 = vadd.f32 %v930, 1.0
          %v932 = vrcp.pop %v931
          %v935 = vunpack.c.l.s4 1966171168
          %v936 = vunpack.c.0.s8 %v935
          %v937 = vlaneseq
          %v938 = vshrl.u32 %v937, 7
          %v939 = vsub.s32 %v936, %v938
          %v940 = vrot.slane %v932, %v939
          %v941 = vcombine.high %v940, %v940
          %v944 = vlaneseq
          %vm945 = vcmp.ge.s32.totalorder %v944, 0
          %vm946 = vcmp.lt.s32.totalorder %v944, 256
          %vm947 = vmand %vm945, %vm946
          %s948 = scalar_lea.vmem %s302, %s319 [#allocation3]
          %949 = vst.msk [vmem:[%s948] ss:$8 sm:$0x3] %vm947, %v940
          %950 = vst.msk [vmem:[%s948] ss:$8 sm:$0x0] %vm947, %v940
          %s951 = scalar_lea.vmem %s302, %s322 [#allocation3]
          %952 = vst.msk [vmem:[%s951] ss:$8 sm:$0x3] %vm947, %v941
          %953 = vst.msk [vmem:[%s951] ss:$8 sm:$0x0] %vm947, %v941
        $region76: #{simple_model_forward_fm.1} parent=66 // loop_footer
          %s310 = sadd.s32 %s308, 1
        $region77: #{simple_model_forward_fm.1} parent=66 // loop_footer_branch
          %307 = sbr.rel target = $region73
        $region78: #{simple_model_forward_fm.1} parent=66 // loop_exit
          _
        %s954 = sand.u32 %s178, 1
        %s955 = sand.u32 %s178, 1
        %s956 = smul.addr %s955, 32
        %s957 = scalar_lea.vmem [#allocation3], %s956
        // Predicated region
        $region79: #{simple_model_forward_fm.1} parent=66 // pred_check
          %p958 = pneg %p188
        $region80: #{simple_model_forward_fm.1} parent=66 // pred_check_branch
          %960 = sbr.rel (%p958) target = $region82
        $region81: #{simple_model_forward_fm.1} parent=66 // pred_region
          %s961 = smul.addr %s18, 2
          %s962 = smul.addr %s961, 8
          %s963 = scalar_lea.vmem %s7, %s962
          // Predicated region
          $region83: #{simple_model_forward_fm.1} parent=81 // pred_check
            _
          $region84: #{simple_model_forward_fm.1} parent=81 // pred_check_branch
            %965 = sbr.rel (0) target = $region86
          $region85: #{simple_model_forward_fm.1} parent=81 // pred_region
            // Predicated region
            $region87: #{simple_model_forward_fm.1} parent=85 // pred_check
              _
            $region88: #{simple_model_forward_fm.1} parent=85 // pred_check_branch
              %967 = sbr.rel (0) target = $region90
            $region89: #{simple_model_forward_fm.1} parent=85 // pred_region
              loop: start=0, step=1, limit=1
              $region91: #{simple_model_forward_fm.1} parent=89 // loop_pre_header
                _
              $region92: #{simple_model_forward_fm.1} parent=89 // loop_header
                %s969 = sphi 0, %s973
                %p970 = scmp.ge.s32.totalorder %s969, 1
                %s974 = sphi %s957, %s957
                %s975 = sphi %s963, %s963
              $region93: #{simple_model_forward_fm.1} parent=89 // loop_header_branch
                %972 = sbr.rel (%p970) target = $region97
              $region94: #{simple_model_forward_fm.1} parent=89 // loop_body
                %v976 = vld [vmem:[%s974] sm:$0xff]
                %977 = vst [vmem:[%s975] sm:$0xff] %v976
                %v978 = vld [vmem:[%s974 + $0x8] sm:$0xff]
                %979 = vst [vmem:[%s975 + $0x8] sm:$0xff] %v978
                %v980 = vld [vmem:[%s974 + $0x10] sm:$0xff]
                %981 = vst [vmem:[%s975 + $0x30] sm:$0xff] %v980
                %v982 = vld [vmem:[%s974 + $0x18] sm:$0xff]
                %983 = vst [vmem:[%s975 + $0x38] sm:$0xff] %v982
              $region95: #{simple_model_forward_fm.1} parent=89 // loop_footer
                %s973 = sadd.s32 1, %s969
              $region96: #{simple_model_forward_fm.1} parent=89 // loop_footer_branch
                %968 = sbr.rel target = $region92
              $region97: #{simple_model_forward_fm.1} parent=89 // loop_exit
                _
            $region90: #{simple_model_forward_fm.1} parent=85 // pred_fallthru
              _
            // Predicated region
            $region98: #{simple_model_forward_fm.1} parent=85 // pred_check
              _
            $region99: #{simple_model_forward_fm.1} parent=85 // pred_check_branch
              %985 = sbr.rel target = $region101
            $region100: #{simple_model_forward_fm.1} parent=85 // pred_region
              _
            $region101: #{simple_model_forward_fm.1} parent=85 // pred_fallthru
              _
          $region86: #{simple_model_forward_fm.1} parent=81 // pred_fallthru
            _
          %986 = vnop
        $region82: #{simple_model_forward_fm.1} parent=66 // pred_fallthru
          _
      $region67: #{simple_model_forward_fm.1} parent=5 // pred_fallthru
        _
      %p987 = scmp.le.s32.totalorder 2, %s13
      // Predicated region
      $region102: #{simple_model_forward_fm.1} parent=5 // pred_check
        %p988 = pneg %p987
      $region103: #{simple_model_forward_fm.1} parent=5 // pred_check_branch
        %990 = sbr.rel (%p988) target = $region105
      $region104: #{simple_model_forward_fm.1} parent=5 // pred_region
        %s991 = ssub.s32 %s13, 2
        // Predicated region
        $region106: #{simple_model_forward_fm.1} parent=104 // pred_check
          %p992 = pneg %p194
        $region107: #{simple_model_forward_fm.1} parent=104 // pred_check_branch
          %994 = sbr.rel (%p992) target = $region109
        $region108: #{simple_model_forward_fm.1} parent=104 // pred_region
          %s995 = sand.u32 %s179, 1
          %s996 = sand.u32 %s179, 1
          %s997 = smul.addr %s996, 32
          %s998 = scalar_lea.vmem [#allocation3], %s997
        $region109: #{simple_model_forward_fm.1} parent=104 // pred_fallthru
          _
      $region105: #{simple_model_forward_fm.1} parent=5 // pred_fallthru
        _
    $region6: #{simple_model_forward_fm.1} parent=1 // loop_footer
      %s17 = sadd.s32 1, %s13
    $region7: #{simple_model_forward_fm.1} parent=1 // loop_footer_branch
      %12 = sbr.rel target = $region3
    $region8: #{simple_model_forward_fm.1} parent=1 // loop_exit
      _

</llo_original>
